<compile_context>
chip_gen: v7x
topology: tpu7x:2x2x1
jax: 0.10.0
libtpu: 0.0.40
codegen_flags: <defaults>
</compile_context>

<pallas_src>
import functools

import jax
import jax.numpy as jnp
from jax.experimental import pallas as pl
from jax.experimental.pallas import tpu as pltpu

_LANES = 128
_MIB = 1024 * 1024
_VMEM_LIMIT_BYTES = 32 * _MIB      # explicit scoped-VMEM budget (raises v5e's 16 MiB default)
_VMEM_INPUT_BUDGET = 24 * _MIB     # cap for 2 inputs x 2 pipeline buffers (leaves headroom)


def _cdiv(a, b):
    return (a + b - 1) // b


def _round_up(x, m):
    return ((x + m - 1) // m) * m


def _tensorcores_per_chip():
    """Best-effort TensorCore-per-chip detection: v7x has 2, v5e/v6e have 1."""
    try:
        kind = jax.devices()[0].device_kind.lower()
    except Exception:
        return 1
    return 2 if "v7" in kind else 1


def _losses_kernel(pred_ref, gt_ref, sse_ref, sae_ref, *,
                   valid_rows, tile_rows, steps, needs_mask):
    """Accumulate (8,128) lane/sublane-parallel SSE / SAE partials per split.

    Grid = (n_split, steps).  Axis 0 is 'parallel' (dual-TC split on v7x); axis 1
    streams the data ('arbitrary', reduction axis last).  Output blocks are
    VMEM-resident accumulators (their index_map ignores axis 1).  The ragged
    last tile (grid over-covers the array) is masked with a row iota against the
    static valid-row count; invalid rows contribute exactly zero.
    """
    c = pl.program_id(0)
    i = pl.program_id(1)

    @pl.when(i == 0)
    def _():
        sse_ref[...] = jnp.zeros_like(sse_ref)
        sae_ref[...] = jnp.zeros_like(sae_ref)

    d = pred_ref[...].astype(jnp.float32) - gt_ref[...].astype(jnp.float32)
    if needs_mask:
        row_base = (c * steps + i) * tile_rows
        row_ids = row_base + jax.lax.broadcasted_iota(jnp.int32, d.shape, 0)
        d = jnp.where(row_ids < valid_rows, d, 0.0)

    # Pure-VALU accumulation: group rows into (tile_rows//8, 8, 128) vreg tiles
    # and sum over the leading (vreg) axis; no per-step cross-sublane reduce.
    sse_ref[...] += jnp.sum((d * d).reshape(-1, 8, _LANES), axis=0, keepdims=True)
    sae_ref[...] += jnp.sum(jnp.abs(d).reshape(-1, 8, _LANES), axis=0, keepdims=True)


def _pallas_prefix_sums(pred2d, gt2d, rows, max_tile_rows):
    """Run the streaming kernel over a (rows, 128) slab; return (sum_sq, sum_abs)."""
    dtype = pred2d.dtype
    itemsize = jnp.dtype(dtype).itemsize
    sub = max(8, 32 // itemsize)                 # sublane tiling: f32->8, bf16->16, int8->32

    tile_rows = min(_round_up(max(1, max_tile_rows), sub), _round_up(rows, sub))
    tile_rows = max(sub, tile_rows)
    # Keep 2 inputs x 2 pipeline buffers inside the VMEM budget.
    max_rows_vmem = _VMEM_INPUT_BUDGET // (4 * _LANES * itemsize)
    tile_rows = min(tile_rows, max(sub, (max_rows_vmem // sub) * sub))

    # 2-way split only when the chip actually has two TensorCores (v7x) and
    # there are at least two tiles of data; on 1-TC chips the split is pure overhead.
    n_split = 2 if (_tensorcores_per_chip() == 2 and rows >= 2 * tile_rows) else 1
    steps = _cdiv(rows, tile_rows * n_split)
    needs_mask = (n_split * steps * tile_rows) != rows

    kernel = functools.partial(
        _losses_kernel, valid_rows=rows, tile_rows=tile_rows,
        steps=steps, needs_mask=needs_mask)

    cost = pl.CostEstimate(
        flops=(9 if needs_mask else 5) * rows * _LANES,
        transcendentals=0,
        bytes_accessed=2 * rows * _LANES * itemsize + 2 * n_split * 8 * _LANES * 4,
    )

    sse_p, sae_p = pl.pallas_call(
        kernel,
        out_shape=(
            jax.ShapeDtypeStruct((n_split, 8, _LANES), jnp.float32),
            jax.ShapeDtypeStruct((n_split, 8, _LANES), jnp.float32),
        ),
        grid_spec=pltpu.PrefetchScalarGridSpec(
            num_scalar_prefetch=0,
            grid=(n_split, steps),
            in_specs=[
                pl.BlockSpec((tile_rows, _LANES), lambda c, i: (c * steps + i, 0)),
                pl.BlockSpec((tile_rows, _LANES), lambda c, i: (c * steps + i, 0)),
            ],
            out_specs=[
                pl.BlockSpec((1, 8, _LANES), lambda c, i: (c, 0, 0)),
                pl.BlockSpec((1, 8, _LANES), lambda c, i: (c, 0, 0)),
            ],
        ),
        compiler_params=pltpu.CompilerParams(
            dimension_semantics=("parallel", "arbitrary"),
            vmem_limit_bytes=_VMEM_LIMIT_BYTES,
        ),
        cost_estimate=cost,
    )(pred2d, gt2d)

    return jnp.sum(sse_p), jnp.sum(sae_p)


def _plain_jax_losses(crit_inp, gts):
    diff = crit_inp.astype(jnp.float32) - gts.astype(jnp.float32)
    return jnp.mean(diff * diff), jnp.mean(jnp.abs(diff))


def _pallas_losses(crit_inp, gts, n, max_tile_rows):
    flat_p = crit_inp.reshape(-1)
    flat_g = gts.reshape(-1)
    rows = n // _LANES
    n_main = rows * _LANES
    tail = n - n_main

    sse = jnp.float32(0.0)
    sae = jnp.float32(0.0)

    if rows > 0:
        if tail == 0:
            pred2d = flat_p.reshape(rows, _LANES)          # zero-copy reshape
            gt2d = flat_g.reshape(rows, _LANES)
        else:
            # Contiguous-prefix slice (no full padded copy); the <128-elem tail
            # is folded in with plain JAX below.
            pred2d = flat_p[:n_main].reshape(rows, _LANES)
            gt2d = flat_g[:n_main].reshape(rows, _LANES)
        s, a = _pallas_prefix_sums(pred2d, gt2d, rows, max_tile_rows)
        sse = sse + s
        sae = sae + a

    if tail > 0:
        dt = flat_p[n_main:].astype(jnp.float32) - flat_g[n_main:].astype(jnp.float32)
        sse = sse + jnp.sum(dt * dt)
        sae = sae + jnp.sum(jnp.abs(dt))

    inv_n = 1.0 / float(n)       # mean over the ORIGINAL element count
    return sse * inv_n, sae * inv_n


def multiple_criterions_forward(crit_inp, gts, *, max_tile_rows=8192,
                                min_pallas_elems=1 << 20, force_pallas=False):
    """Equivalent of MultipleCriterions(["mse","l1"], [MSELoss(), L1Loss()])(crit_inp, gts).

    Returns a dict with keys 'total_loss', 'mse', 'l1' (float32 scalars).
    """
    # TODO(synk): container bookkeeping (add/get_items/name2crit) is Python-side
    # module management with no numeric Pallas equivalent; only forward() is kernelized.
    assert crit_inp.shape == gts.shape
    n = int(crit_inp.size)

    if (not force_pallas) and n < min_pallas_elems:
        # Tiny tensors: launch + pipeline fill/drain dwarfs the data movement.
        mse, l1 = _plain_jax_losses(crit_inp, gts)
    else:
        mse, l1 = _pallas_losses(crit_inp, gts, n, max_tile_rows)

    loss = {}
    loss["total_loss"] = mse + l1      # scalar glue, mirrors the Python loop summation
    loss["mse"] = mse
    loss["l1"] = l1
    return loss


if __name__ == "__main__":
    key = jax.random.PRNGKey(0)

    # (shape, dtype, max_tile_rows) — exercises: aligned slab, ragged rows+tail
    # (in-kernel mask + JAX tail), multi-step accumulation, and a bf16 slab.
    cases = [
        ((2, 4, 16, 16), jnp.float32, 8192),   # aligned small NCHW, single tile
        ((2, 3, 17, 19), jnp.float32, 8192),   # ragged: row mask + <128-elem tail path
        ((4, 8, 64, 64), jnp.float32, 128),    # forced small tiles: multi-step accumulation
        ((2, 4, 16, 16), jnp.bfloat16, 8192),  # bf16 stays bf16 in HBM; f32 cast in-kernel
    ]

    ok = True
    for idx, (shape, dtype, mtr) in enumerate(cases):
        k1, k2 = jax.random.split(jax.random.fold_in(key, idx))
        crit_inp = jax.random.normal(k1, shape, dtype=jnp.float32).astype(dtype)
        gts = jax.random.normal(k2, shape, dtype=jnp.float32).astype(dtype)

        fwd = jax.jit(functools.partial(multiple_criterions_forward,
                                        max_tile_rows=mtr, force_pallas=True))
        out = fwd(crit_inp, gts)
        out = jax.tree_util.tree_map(jax.block_until_ready, out)

        # Reference (plain JAX, f32 math) — same semantics as MSELoss()/L1Loss() mean reduction.
        dref = crit_inp.astype(jnp.float32) - gts.astype(jnp.float32)
        ref_mse = jnp.mean(dref * dref)
        ref_l1 = jnp.mean(jnp.abs(dref))
        ok &= bool(jnp.allclose(out["mse"], ref_mse, rtol=1e-5, atol=1e-6))
        ok &= bool(jnp.allclose(out["l1"], ref_l1, rtol=1e-5, atol=1e-6))
        ok &= bool(jnp.allclose(out["total_loss"], ref_mse + ref_l1, rtol=1e-5, atol=1e-6))

    if ok:
        print("KERNEL_OK")
    else:
        raise SystemExit("mismatch vs reference")
</pallas_src>

<mosaic_0001>
module attributes {stable_mosaic.version = 11 : i64} {
  func.func @_losses_kernel(%arg0: i32, %arg1: i32, %arg2: memref<16x128xf32, #tpu.memory_space<vmem>>, %arg3: memref<16x128xf32, #tpu.memory_space<vmem>>, %arg4: memref<1x8x128xf32, #tpu.memory_space<vmem>>, %arg5: memref<1x8x128xf32, #tpu.memory_space<vmem>>) attributes {dimension_semantics = [#tpu.dimension_semantics<parallel>, #tpu.dimension_semantics<arbitrary>], iteration_bounds = array<i64: 1, 1>, scalar_prefetch = 0 : i64, scratch_operands = 0 : i64, tpu.core_type = #tpu.core_type<tc>, window_params = [{transform_indices = @transform_0, window_bounds = array<i64: 16, 128>}, {transform_indices = @transform_1, window_bounds = array<i64: 16, 128>}, {transform_indices = @transform_2, window_bounds = array<i64: 1, 8, 128>}, {transform_indices = @transform_3, window_bounds = array<i64: 1, 8, 128>}]} {
    %c0_i32 = arith.constant 0 : i32
    %0 = arith.cmpi eq, %arg1, %c0_i32 : i32
    %1 = arith.extui %0 : i1 to i32
    %c0_i32_0 = arith.constant 0 : i32
    %2 = arith.cmpi ne, %1, %c0_i32_0 : i32
    scf.if %2 {
      %cst_17 = arith.constant 0.000000e+00 : f32
      %20 = vector.broadcast %cst_17 : f32 to vector<1x8x128xf32>
      %c0_18 = arith.constant 0 : index
      %c0_19 = arith.constant 0 : index
      %c0_20 = arith.constant 0 : index
      %21 = vector.load %arg4[%c0_18, %c0_19, %c0_20] : memref<1x8x128xf32, #tpu.memory_space<vmem>>, vector<1x8x128xf32>
      tpu.vector_store %arg4[%c0_18, %c0_19, %c0_20], %20 {strides = array<i32>} : memref<1x8x128xf32, #tpu.memory_space<vmem>>, vector<1x8x128xf32>,
      %cst_21 = arith.constant 0.000000e+00 : f32
      %22 = vector.broadcast %cst_21 : f32 to vector<1x8x128xf32>
      %c0_22 = arith.constant 0 : index
      %c0_23 = arith.constant 0 : index
      %c0_24 = arith.constant 0 : index
      %23 = vector.load %arg5[%c0_22, %c0_23, %c0_24] : memref<1x8x128xf32, #tpu.memory_space<vmem>>, vector<1x8x128xf32>
      tpu.vector_store %arg5[%c0_22, %c0_23, %c0_24], %22 {strides = array<i32>} : memref<1x8x128xf32, #tpu.memory_space<vmem>>, vector<1x8x128xf32>,
    } else {
    }
    %c0 = arith.constant 0 : index
    %c0_1 = arith.constant 0 : index
    %3 = vector.load %arg2[%c0, %c0_1] : memref<16x128xf32, #tpu.memory_space<vmem>>, vector<16x128xf32>
    %c0_2 = arith.constant 0 : index
    %c0_3 = arith.constant 0 : index
    %4 = vector.load %arg3[%c0_2, %c0_3] : memref<16x128xf32, #tpu.memory_space<vmem>>, vector<16x128xf32>
    %5 = arith.subf %3, %4 : vector<16x128xf32>
    %c0_4 = arith.constant 0 : index
    %c0_5 = arith.constant 0 : index
    %c0_6 = arith.constant 0 : index
    %6 = vector.load %arg4[%c0_4, %c0_5, %c0_6] : memref<1x8x128xf32, #tpu.memory_space<vmem>>, vector<1x8x128xf32>
    %7 = arith.mulf %5, %5 : vector<16x128xf32>
    %8 = vector.shape_cast %7 : vector<16x128xf32> to vector<2x8x128xf32>
    %cst = arith.constant dense<0.000000e+00> : vector<8x128xf32>
    %9 = vector.multi_reduction <add>, %8, %cst [0] : vector<2x8x128xf32> to vector<8x128xf32>
    %10 = vector.shape_cast %9 : vector<8x128xf32> to vector<1x8x128xf32>
    %11 = arith.addf %6, %10 : vector<1x8x128xf32>
    %c0_7 = arith.constant 0 : index
    %c0_8 = arith.constant 0 : index
    %c0_9 = arith.constant 0 : index
    %12 = vector.load %arg4[%c0_7, %c0_8, %c0_9] : memref<1x8x128xf32, #tpu.memory_space<vmem>>, vector<1x8x128xf32>
    tpu.vector_store %arg4[%c0_7, %c0_8, %c0_9], %11 {strides = array<i32>} : memref<1x8x128xf32, #tpu.memory_space<vmem>>, vector<1x8x128xf32>,
    %c0_10 = arith.constant 0 : index
    %c0_11 = arith.constant 0 : index
    %c0_12 = arith.constant 0 : index
    %13 = vector.load %arg5[%c0_10, %c0_11, %c0_12] : memref<1x8x128xf32, #tpu.memory_space<vmem>>, vector<1x8x128xf32>
    %14 = math.absf %5 : vector<16x128xf32>
    %15 = vector.shape_cast %14 : vector<16x128xf32> to vector<2x8x128xf32>
    %cst_13 = arith.constant dense<0.000000e+00> : vector<8x128xf32>
    %16 = vector.multi_reduction <add>, %15, %cst_13 [0] : vector<2x8x128xf32> to vector<8x128xf32>
    %17 = vector.shape_cast %16 : vector<8x128xf32> to vector<1x8x128xf32>
    %18 = arith.addf %13, %17 : vector<1x8x128xf32>
    %c0_14 = arith.constant 0 : index
    %c0_15 = arith.constant 0 : index
    %c0_16 = arith.constant 0 : index
    %19 = vector.load %arg5[%c0_14, %c0_15, %c0_16] : memref<1x8x128xf32, #tpu.memory_space<vmem>>, vector<1x8x128xf32>
    tpu.vector_store %arg5[%c0_14, %c0_15, %c0_16], %18 {strides = array<i32>} : memref<1x8x128xf32, #tpu.memory_space<vmem>>, vector<1x8x128xf32>,
    return
  }
  func.func @transform_0(%arg0: i32, %arg1: i32) -> (i32, i32) {
    %c1_i32 = arith.constant 1 : i32
    %0 = arith.muli %arg0, %c1_i32 : i32
    %1 = arith.addi %0, %arg1 : i32
    %c0_i32 = arith.constant 0 : i32
    %c0_i32_0 = arith.constant 0 : i32
    return %1, %c0_i32 : i32, i32
  }
  func.func @transform_1(%arg0: i32, %arg1: i32) -> (i32, i32) {
    %c1_i32 = arith.constant 1 : i32
    %0 = arith.muli %arg0, %c1_i32 : i32
    %1 = arith.addi %0, %arg1 : i32
    %c0_i32 = arith.constant 0 : i32
    %c0_i32_0 = arith.constant 0 : i32
    return %1, %c0_i32 : i32, i32
  }
  func.func @transform_2(%arg0: i32, %arg1: i32) -> (i32, i32, i32) {
    %c0_i32 = arith.constant 0 : i32
    %c0_i32_0 = arith.constant 0 : i32
    %c0_i32_1 = arith.constant 0 : i32
    return %arg0, %c0_i32, %c0_i32_0 : i32, i32, i32
  }
  func.func @transform_3(%arg0: i32, %arg1: i32) -> (i32, i32, i32) {
    %c0_i32 = arith.constant 0 : i32
    %c0_i32_0 = arith.constant 0 : i32
    %c0_i32_1 = arith.constant 0 : i32
    return %arg0, %c0_i32, %c0_i32_0 : i32, i32, i32
  }
}

</mosaic_0001>

<llo_original>
// kernel: multiple_criterions_forward.1
$region0: #{multiple_criterions_forward.1}
  #allocation0 [shape = 'u32[]', space=smem, size = 0x4, offset = 0x4, fixed_abs, tag = 'smem constant byte address 0x4 - core index']
  #allocation1 [shape = 'u32[144,128]{1,0:T(1,128)}', space=vmem, size = 0x12000, scoped, tag = 'internal scratch']
  %s0 = inlined_call_operand.vmem [shape: f32[16,128], index: 0, kind: input, shape index: {}]
  %s1 = inlined_call_operand.vmem [shape: f32[16,128], index: 1, kind: input, shape index: {}]
  %s2 = inlined_call_operand.vmem [shape: f32[1,8,128], index: 2, kind: output, shape index: {0}]
  %s3 = inlined_call_operand.vmem [shape: f32[1,8,128], index: 3, kind: output, shape index: {1}]
  %4 = xla_tuple %s2, %s3
  %s5 = sld [smem:[#allocation0]]
  $region30: #{multiple_criterions_forward.1} parent=0
    _
  %s7 = ssub.s32 1, %s5
  %s8 = scalar_select 0, %s7, %s5
  // Predicated region
  $region2: #{multiple_criterions_forward.1} parent=0 // pred_check
    _
  $region3: #{multiple_criterions_forward.1} parent=0 // pred_check_branch
    %10 = sbr.rel (0) target = $region5
  $region4: #{multiple_criterions_forward.1} parent=0 // pred_region
    %s11 = sadd.s32 0, 0
    %s12 = smul.u32 2, %s11
    %p13 = scmp.lt.s32.totalorder %s12, 1
    %s14 = scalar_select %p13, %s12, 1
    %s15 = smul.addr %s14, 8
    %s16 = scalar_lea.vmem %s0, %s15
    %s17 = sadd.s32 0, 0
    %s18 = smul.u32 2, %s17
  $region5: #{multiple_criterions_forward.1} parent=0 // pred_fallthru
    _
  // Predicated region
  $region6: #{multiple_criterions_forward.1} parent=0 // pred_check
    _
  $region7: #{multiple_criterions_forward.1} parent=0 // pred_check_branch
    %20 = sbr.rel (0) target = $region9
  $region8: #{multiple_criterions_forward.1} parent=0 // pred_region
    %s21 = sadd.s32 0, 0
    %s22 = smul.u32 2, %s21
    %p23 = scmp.lt.s32.totalorder %s22, 1
    %s24 = scalar_select %p23, %s22, 1
    %s25 = smul.addr %s24, 8
    %s26 = scalar_lea.vmem %s1, %s25
    %s27 = sadd.s32 0, 0
    %s28 = smul.u32 2, %s27
  $region9: #{multiple_criterions_forward.1} parent=0 // pred_fallthru
    _
  %s29 = sadd.s32 0, 0
  %s30 = smul.u32 2, %s29
  %p31 = scmp.lt.s32.totalorder %s30, 1
  %s32 = scalar_select %p31, %s30, 1
  %s33 = smul.addr %s32, 8
  %s34 = scalar_lea.vmem %s0, %s33
  %s35 = sadd.s32 0, 0
  %s36 = smul.u32 2, %s35
  %p37 = scmp.lt.s32.totalorder %s36, 1
  %s38 = scalar_select %p37, %s36, 1
  %s39 = smul.addr %s38, 8
  %s40 = scalar_lea.vmem %s1, %s39
  %s41 = sadd.s32 0, 0
  %s42 = smul.u32 2, %s41
  %p43 = scmp.lt.s32.totalorder %s42, 1
  %s44 = scalar_select %p43, %s42, 1
  %s45 = smul.addr %s44, 8
  %s46 = scalar_lea.vmem %s0, %s45
  %s47 = sadd.s32 0, 0
  %s48 = smul.u32 2, %s47
  %s49 = sadd.s32 0, 0
  %s50 = smul.u32 2, %s49
  %p51 = scmp.lt.s32.totalorder %s50, 1
  %s52 = scalar_select %p51, %s50, 1
  %s53 = smul.addr %s52, 8
  %s54 = scalar_lea.vmem %s1, %s53
  %s55 = sadd.s32 0, 0
  %s56 = smul.u32 2, %s55
  %p57 = scmp.eq.s32.totalorder 0, 0
  // Predicated region
  $region10: #{multiple_criterions_forward.1} parent=0 // pred_check
    %p58 = pneg %p57
  $region11: #{multiple_criterions_forward.1} parent=0 // pred_check_branch
    %60 = sbr.rel (%p58) target = $region13
  $region12: #{multiple_criterions_forward.1} parent=0 // pred_region
    %61 = vst [vmem:[%s2] sm:$0xff] 0.0
    %62 = vst [vmem:[%s3] sm:$0xff] 0.0
  $region13: #{multiple_criterions_forward.1} parent=0 // pred_fallthru
    _
  %v63 = vld [vmem:[%s46] sm:$0xff]
  %v64 = vld [vmem:[%s46 + $0x8] sm:$0xff]
  %v65 = vld [vmem:[%s54] sm:$0xff]
  %v66 = vld [vmem:[%s54 + $0x8] sm:$0xff]
  %v67 = vsub.f32 %v63, %v65
  %v68 = vsub.f32 %v64, %v66
  %v69 = vld [vmem:[%s2] sm:$0xff]
  %v70 = vmul.f32 %v67, %v67
  %v71 = vmul.f32 %v68, %v68
  %v72 = vadd.f32 %v70, %v71
  %v73 = vadd.f32 %v69, %v72
  %74 = vst [vmem:[%s2] sm:$0xff] %v73
  %v75 = vld [vmem:[%s3] sm:$0xff]
  %v76 = vand.u32 2147483647, %v67
  %v77 = vand.u32 2147483647, %v68
  %v78 = vadd.f32 %v76, %v77
  %v79 = vadd.f32 %v75, %v78
  %80 = vst [vmem:[%s3] sm:$0xff] %v79
  // Predicated region
  $region14: #{multiple_criterions_forward.1} parent=0 // pred_check
    _
  $region15: #{multiple_criterions_forward.1} parent=0 // pred_check_branch
    %82 = sbr.rel (0) target = $region17
  $region16: #{multiple_criterions_forward.1} parent=0 // pred_region
    _
  $region17: #{multiple_criterions_forward.1} parent=0 // pred_fallthru
    _
  // Predicated region
  $region18: #{multiple_criterions_forward.1} parent=0 // pred_check
    _
  $region19: #{multiple_criterions_forward.1} parent=0 // pred_check_branch
    %84 = sbr.rel (0) target = $region21
  $region20: #{multiple_criterions_forward.1} parent=0 // pred_region
    _
  $region21: #{multiple_criterions_forward.1} parent=0 // pred_fallthru
    _
  // Predicated region
  $region22: #{multiple_criterions_forward.1} parent=0 // pred_check
    _
  $region23: #{multiple_criterions_forward.1} parent=0 // pred_check_branch
    %86 = sbr.rel (0) target = $region25
  $region24: #{multiple_criterions_forward.1} parent=0 // pred_region
    _
  $region25: #{multiple_criterions_forward.1} parent=0 // pred_fallthru
    _
  // Predicated region
  $region26: #{multiple_criterions_forward.1} parent=0 // pred_check
    _
  $region27: #{multiple_criterions_forward.1} parent=0 // pred_check_branch
    %88 = sbr.rel (0) target = $region29
  $region28: #{multiple_criterions_forward.1} parent=0 // pred_region
    _
  $region29: #{multiple_criterions_forward.1} parent=0 // pred_fallthru
    _

</llo_original>
